<compile_context>
chip_gen: v7x
topology: tpu7x:2x2x1
jax: 0.10.0
libtpu: 0.0.40
codegen_flags: <defaults>
</compile_context>

<pallas_src>
import jax
import jax.numpy as jnp
from jax.experimental import pallas as pl
from jax.experimental.pallas import tpu as pltpu

# Scaled-down config (original: hidden=768, vocab=50265, word_len=51).
SOFT_PROMPT_LEN = 10   # cfg.soft_prompt_length
HIDDEN = 128           # model.config.hidden_size (scaled down, lane-aligned)
VOCAB = 64
BATCH = 2
SEQ = 16               # must be >= SOFT_PROMPT_LEN


def soft_prompt_wte(ids, emb_table, soft_prompt):
    """out = emb_table[ids]; out[:, :P] = soft_prompt (broadcast over batch)."""
    B, S = ids.shape
    V, H = emb_table.shape
    P, Hp = soft_prompt.shape
    assert Hp == H and P <= S

    def kernel(ids_ref, emb_ref, prompt_ref, out_ref):
        # ids_ref:    SMEM (B, S) int32  scalar-prefetched token ids.
        # emb_ref:    VMEM (V, H)        embedding table; constant index_map -> DMA'd once.
        # prompt_ref: VMEM (P, H)        soft prompt;     constant index_map -> DMA'd once.
        # out_ref:    VMEM (S, H)        per-batch output slab (batch dim squeezed).
        b = pl.program_id(0)

        # 1) Prompt region [0, P): exactly the soft prompt (broadcast over batch).
        #    One dense store -- no gather, no iota/where, no RMW of out_ref.
        out_ref[pl.ds(0, P), :] = prompt_ref[...]

        # 2) Remaining positions [P, S): gather rows from the VMEM-resident table
        #    by scalar id (SMEM scalar read + dynamic sublane load).  Small static
        #    unroll here; for large S use lax.fori_loop(..., unroll=True) groups or
        #    add a sequence grid axis with ~0.5-1.5 MiB output tiles.
        for i in range(P, S):
            tok = ids_ref[b, i]
            tok = jnp.minimum(jnp.maximum(tok, 0), V - 1)  # clamp: no VMEM bounds check
            out_ref[pl.ds(i, 1), :] = emb_ref[pl.ds(tok, 1), :]

    bytes_accessed = (B * S * 4          # token ids (SMEM prefetch)
                      + V * H * 4        # embedding table, fetched once
                      + P * H * 4        # soft prompt, fetched once
                      + B * S * H * 4)   # output writeback

    grid_spec = pltpu.PrefetchScalarGridSpec(
        num_scalar_prefetch=1,
        grid=(B,),
        in_specs=[
            # Whole table / prompt, VMEM-resident; constant index_map means the
            # pipeline fetches each exactly once for the whole grid.
            pl.BlockSpec((V, H), lambda b, ids_ref: (0, 0)),
            pl.BlockSpec((P, H), lambda b, ids_ref: (0, 0)),
        ],
        # Leading batch dim squeezed -> kernel sees one dense (S, H) slab.
        out_specs=pl.BlockSpec((None, S, H), lambda b, ids_ref: (b, 0, 0)),
    )

    return pl.pallas_call(
        kernel,
        out_shape=jax.ShapeDtypeStruct((B, S, H), emb_table.dtype),
        grid_spec=grid_spec,
        compiler_params=pltpu.CompilerParams(
            dimension_semantics=("parallel",)),
        cost_estimate=pl.CostEstimate(flops=0, transcendentals=0,
                                      bytes_accessed=bytes_accessed),
    )(ids, emb_table, soft_prompt.astype(emb_table.dtype))


if __name__ == "__main__":
    key = jax.random.PRNGKey(0)
    k_emb, k_prompt, k_ids = jax.random.split(key, 3)

    # Deterministic synthetic parameters (module __init__: pretrained wte
    # weight + torch.randn soft prompt).
    emb_table = jax.random.normal(k_emb, (VOCAB, HIDDEN), dtype=jnp.float32)
    soft_prompt = jax.random.normal(k_prompt, (SOFT_PROMPT_LEN, HIDDEN),
                                    dtype=jnp.float32)
    ids = jax.random.randint(k_ids, (BATCH, SEQ), 0, VOCAB, dtype=jnp.int32)

    out = soft_prompt_wte(ids, emb_table, soft_prompt)
    out = jax.block_until_ready(out)

    # Pure-JAX reference for correctness.
    ref = emb_table[ids]
    ref = ref.at[:, :SOFT_PROMPT_LEN].set(soft_prompt[None])
    assert out.shape == (BATCH, SEQ, HIDDEN)
    assert jnp.allclose(out, ref), "mismatch vs reference"

    print("KERNEL_OK")
</pallas_src>

<mosaic_0001>
module attributes {stable_mosaic.version = 11 : i64} {
  func.func @kernel(%arg0: i32, %arg1: memref<2x16xi32, #tpu.memory_space<smem>>, %arg2: memref<64x128xf32, #tpu.memory_space<vmem>>, %arg3: memref<10x128xf32, #tpu.memory_space<vmem>>, %arg4: memref<1x16x128xf32, #tpu.memory_space<vmem>>) attributes {dimension_semantics = [#tpu.dimension_semantics<parallel>], iteration_bounds = array<i64: 2>, scalar_prefetch = 1 : i64, scratch_operands = 0 : i64, tpu.core_type = #tpu.core_type<tc>, window_params = [{pipeline_mode = #tpu.pipeline_mode<synchronous>, transform_indices = @transform_0, window_bounds = array<i64: 64, 128>}, {pipeline_mode = #tpu.pipeline_mode<synchronous>, transform_indices = @transform_1, window_bounds = array<i64: 10, 128>}, {transform_indices = @transform_2, window_bounds = array<i64: 1, 16, 128>}]} {
    %c0 = arith.constant 0 : index
    %c0_0 = arith.constant 0 : index
    %0 = vector.load %arg3[%c0, %c0_0] : memref<10x128xf32, #tpu.memory_space<vmem>>, vector<10x128xf32>
    %c0_1 = arith.constant 0 : index
    %c0_2 = arith.constant 0 : index
    %c0_3 = arith.constant 0 : index
    %1 = vector.load %arg4[%c0_1, %c0_2, %c0_3] : memref<1x16x128xf32, #tpu.memory_space<vmem>>, vector<1x10x128xf32>
    %2 = vector.shape_cast %1 : vector<1x10x128xf32> to vector<10x128xf32>
    %3 = vector.shape_cast %0 : vector<10x128xf32> to vector<1x10x128xf32>
    tpu.vector_store %arg4[%c0_1, %c0_2, %c0_3], %3 {strides = array<i32>} : memref<1x16x128xf32, #tpu.memory_space<vmem>>, vector<1x10x128xf32>,
    %4 = arith.index_cast %arg0 : i32 to index
    %c10 = arith.constant 10 : index
    %5 = memref.load %arg1[%4, %c10] : memref<2x16xi32, #tpu.memory_space<smem>>
    %c0_i32 = arith.constant 0 : i32
    %6 = arith.maxsi %5, %c0_i32 : i32
    %c63_i32 = arith.constant 63 : i32
    %7 = arith.minsi %6, %c63_i32 : i32
    %8 = arith.index_cast %7 : i32 to index
    %c0_4 = arith.constant 0 : index
    %9 = vector.load %arg2[%8, %c0_4] : memref<64x128xf32, #tpu.memory_space<vmem>>, vector<1x128xf32>
    %c0_5 = arith.constant 0 : index
    %c10_6 = arith.constant 10 : index
    %c0_7 = arith.constant 0 : index
    %10 = vector.load %arg4[%c0_5, %c10_6, %c0_7] : memref<1x16x128xf32, #tpu.memory_space<vmem>>, vector<1x1x128xf32>
    %11 = vector.shape_cast %10 : vector<1x1x128xf32> to vector<1x128xf32>
    %12 = vector.shape_cast %9 : vector<1x128xf32> to vector<1x1x128xf32>
    tpu.vector_store %arg4[%c0_5, %c10_6, %c0_7], %12 {strides = array<i32>} : memref<1x16x128xf32, #tpu.memory_space<vmem>>, vector<1x1x128xf32>,
    %13 = arith.index_cast %arg0 : i32 to index
    %c11 = arith.constant 11 : index
    %14 = memref.load %arg1[%13, %c11] : memref<2x16xi32, #tpu.memory_space<smem>>
    %c0_i32_8 = arith.constant 0 : i32
    %15 = arith.maxsi %14, %c0_i32_8 : i32
    %c63_i32_9 = arith.constant 63 : i32
    %16 = arith.minsi %15, %c63_i32_9 : i32
    %17 = arith.index_cast %16 : i32 to index
    %c0_10 = arith.constant 0 : index
    %18 = vector.load %arg2[%17, %c0_10] : memref<64x128xf32, #tpu.memory_space<vmem>>, vector<1x128xf32>
    %c0_11 = arith.constant 0 : index
    %c11_12 = arith.constant 11 : index
    %c0_13 = arith.constant 0 : index
    %19 = vector.load %arg4[%c0_11, %c11_12, %c0_13] : memref<1x16x128xf32, #tpu.memory_space<vmem>>, vector<1x1x128xf32>
    %20 = vector.shape_cast %19 : vector<1x1x128xf32> to vector<1x128xf32>
    %21 = vector.shape_cast %18 : vector<1x128xf32> to vector<1x1x128xf32>
    tpu.vector_store %arg4[%c0_11, %c11_12, %c0_13], %21 {strides = array<i32>} : memref<1x16x128xf32, #tpu.memory_space<vmem>>, vector<1x1x128xf32>,
    %22 = arith.index_cast %arg0 : i32 to index
    %c12 = arith.constant 12 : index
    %23 = memref.load %arg1[%22, %c12] : memref<2x16xi32, #tpu.memory_space<smem>>
    %c0_i32_14 = arith.constant 0 : i32
    %24 = arith.maxsi %23, %c0_i32_14 : i32
    %c63_i32_15 = arith.constant 63 : i32
    %25 = arith.minsi %24, %c63_i32_15 : i32
    %26 = arith.index_cast %25 : i32 to index
    %c0_16 = arith.constant 0 : index
    %27 = vector.load %arg2[%26, %c0_16] : memref<64x128xf32, #tpu.memory_space<vmem>>, vector<1x128xf32>
    %c0_17 = arith.constant 0 : index
    %c12_18 = arith.constant 12 : index
    %c0_19 = arith.constant 0 : index
    %28 = vector.load %arg4[%c0_17, %c12_18, %c0_19] : memref<1x16x128xf32, #tpu.memory_space<vmem>>, vector<1x1x128xf32>
    %29 = vector.shape_cast %28 : vector<1x1x128xf32> to vector<1x128xf32>
    %30 = vector.shape_cast %27 : vector<1x128xf32> to vector<1x1x128xf32>
    tpu.vector_store %arg4[%c0_17, %c12_18, %c0_19], %30 {strides = array<i32>} : memref<1x16x128xf32, #tpu.memory_space<vmem>>, vector<1x1x128xf32>,
    %31 = arith.index_cast %arg0 : i32 to index
    %c13 = arith.constant 13 : index
    %32 = memref.load %arg1[%31, %c13] : memref<2x16xi32, #tpu.memory_space<smem>>
    %c0_i32_20 = arith.constant 0 : i32
    %33 = arith.maxsi %32, %c0_i32_20 : i32
    %c63_i32_21 = arith.constant 63 : i32
    %34 = arith.minsi %33, %c63_i32_21 : i32
    %35 = arith.index_cast %34 : i32 to index
    %c0_22 = arith.constant 0 : index
    %36 = vector.load %arg2[%35, %c0_22] : memref<64x128xf32, #tpu.memory_space<vmem>>, vector<1x128xf32>
    %c0_23 = arith.constant 0 : index
    %c13_24 = arith.constant 13 : index
    %c0_25 = arith.constant 0 : index
    %37 = vector.load %arg4[%c0_23, %c13_24, %c0_25] : memref<1x16x128xf32, #tpu.memory_space<vmem>>, vector<1x1x128xf32>
    %38 = vector.shape_cast %37 : vector<1x1x128xf32> to vector<1x128xf32>
    %39 = vector.shape_cast %36 : vector<1x128xf32> to vector<1x1x128xf32>
    tpu.vector_store %arg4[%c0_23, %c13_24, %c0_25], %39 {strides = array<i32>} : memref<1x16x128xf32, #tpu.memory_space<vmem>>, vector<1x1x128xf32>,
    %40 = arith.index_cast %arg0 : i32 to index
    %c14 = arith.constant 14 : index
    %41 = memref.load %arg1[%40, %c14] : memref<2x16xi32, #tpu.memory_space<smem>>
    %c0_i32_26 = arith.constant 0 : i32
    %42 = arith.maxsi %41, %c0_i32_26 : i32
    %c63_i32_27 = arith.constant 63 : i32
    %43 = arith.minsi %42, %c63_i32_27 : i32
    %44 = arith.index_cast %43 : i32 to index
    %c0_28 = arith.constant 0 : index
    %45 = vector.load %arg2[%44, %c0_28] : memref<64x128xf32, #tpu.memory_space<vmem>>, vector<1x128xf32>
    %c0_29 = arith.constant 0 : index
    %c14_30 = arith.constant 14 : index
    %c0_31 = arith.constant 0 : index
    %46 = vector.load %arg4[%c0_29, %c14_30, %c0_31] : memref<1x16x128xf32, #tpu.memory_space<vmem>>, vector<1x1x128xf32>
    %47 = vector.shape_cast %46 : vector<1x1x128xf32> to vector<1x128xf32>
    %48 = vector.shape_cast %45 : vector<1x128xf32> to vector<1x1x128xf32>
    tpu.vector_store %arg4[%c0_29, %c14_30, %c0_31], %48 {strides = array<i32>} : memref<1x16x128xf32, #tpu.memory_space<vmem>>, vector<1x1x128xf32>,
    %49 = arith.index_cast %arg0 : i32 to index
    %c15 = arith.constant 15 : index
    %50 = memref.load %arg1[%49, %c15] : memref<2x16xi32, #tpu.memory_space<smem>>
    %c0_i32_32 = arith.constant 0 : i32
    %51 = arith.maxsi %50, %c0_i32_32 : i32
    %c63_i32_33 = arith.constant 63 : i32
    %52 = arith.minsi %51, %c63_i32_33 : i32
    %53 = arith.index_cast %52 : i32 to index
    %c0_34 = arith.constant 0 : index
    %54 = vector.load %arg2[%53, %c0_34] : memref<64x128xf32, #tpu.memory_space<vmem>>, vector<1x128xf32>
    %c0_35 = arith.constant 0 : index
    %c15_36 = arith.constant 15 : index
    %c0_37 = arith.constant 0 : index
    %55 = vector.load %arg4[%c0_35, %c15_36, %c0_37] : memref<1x16x128xf32, #tpu.memory_space<vmem>>, vector<1x1x128xf32>
    %56 = vector.shape_cast %55 : vector<1x1x128xf32> to vector<1x128xf32>
    %57 = vector.shape_cast %54 : vector<1x128xf32> to vector<1x1x128xf32>
    tpu.vector_store %arg4[%c0_35, %c15_36, %c0_37], %57 {strides = array<i32>} : memref<1x16x128xf32, #tpu.memory_space<vmem>>, vector<1x1x128xf32>,
    return
  }
  func.func @transform_0(%arg0: i32, %arg1: memref<2x16xi32, #tpu.memory_space<smem>>) -> (i32, i32) {
    %c0_i32 = arith.constant 0 : i32
    %c0_i32_0 = arith.constant 0 : i32
    %c0_i32_1 = arith.constant 0 : i32
    return %c0_i32, %c0_i32_0 : i32, i32
  }
  func.func @transform_1(%arg0: i32, %arg1: memref<2x16xi32, #tpu.memory_space<smem>>) -> (i32, i32) {
    %c0_i32 = arith.constant 0 : i32
    %c0_i32_0 = arith.constant 0 : i32
    %c0_i32_1 = arith.constant 0 : i32
    return %c0_i32, %c0_i32_0 : i32, i32
  }
  func.func @transform_2(%arg0: i32, %arg1: memref<2x16xi32, #tpu.memory_space<smem>>) -> (i32, i32, i32) {
    %c0_i32 = arith.constant 0 : i32
    %c0_i32_0 = arith.constant 0 : i32
    %c0_i32_1 = arith.constant 0 : i32
    return %arg0, %c0_i32, %c0_i32_0 : i32, i32, i32
  }
}

</mosaic_0001>

<llo_original>
// kernel: tpu_custom_call.1
$region0: #{tpu_custom_call.1}
  #allocation0 [shape = 'u32[]', space=smem, size = 0x4, offset = 0x4, fixed_abs, tag = 'smem constant byte address 0x4 - core index']
  #allocation1 [shape = 'u32[144,128]{1,0:T(1,128)}', space=vmem, size = 0x12000, scoped, tag = 'internal scratch']
  #allocation2 [shape = 's32[1]{0}', space=sflag, size = 0x4, scoped, tag = 'scoped memory for tpu_custom_call.1']
  #allocation3 [shape = 'u8[1024]{0}', space=smem, size = 0x400, scoped, tag = 'prefetched SMEM operand 0']
  %s0 = inlined_call_operand.hbm [shape: s32[2,16], index: 0, kind: input, shape index: {}]
  %s1 = inlined_call_operand.hbm [shape: f32[64,128], index: 1, kind: input, shape index: {}]
  %s2 = inlined_call_operand.hbm [shape: f32[10,128], index: 2, kind: input, shape index: {}]
  %s3 = inlined_call_operand.hbm [shape: f32[2,16,128], index: 3, kind: output, shape index: {}]
  %s4 = sld [smem:[#allocation0]]
  $region49: #{tpu_custom_call.1} parent=0
    _
  %s6 = ssub.s32 1, %s4
  %s7 = scalar_select 0, %s6, %s4
  %9 = dma.hbm_to_smem %s0, 32, [#allocation3], [#allocation2]
  %10 = dma.done [#allocation2], 32
  %11 = sfence
  $region1: #{tpu_custom_call.1} parent=0
    #allocation4 [shape = 'u8[32768]{0}', space=vmem, size = 0x8000, scoped, tag = 'input window, operand 1, single buffered']
    #allocation5 [shape = 's32[2]{0}', space=sflag, size = 0x8, scoped, tag = 'scoped memory for tpu_custom_call.1']
    #allocation6 [shape = 's32[2]{0}', space=sflag, size = 0x8, scoped, tag = 'scoped memory for tpu_custom_call.1']
    #allocation7 [shape = 'u8[8192]{0}', space=vmem, size = 0x2000, scoped, tag = 'input window, operand 2, single buffered']
    #allocation8 [shape = 's32[1]{0}', space=sflag, size = 0x4, scoped, tag = 'scoped memory for tpu_custom_call.1']
    #allocation9 [shape = 'u8[16384]{0}', space=vmem, size = 0x4000, scoped, tag = 'output window, operand 0']
    %12 = vsyncpa [#allocation5], 0
    %13 = vsyncpa [#allocation8], 0
    %14 = vsyncpa [#allocation6], 0
    %s15 = scalar_lea.sflag [#allocation6], 1
    %16 = vsyncpa %s15, 0
    loop: start=0, step=1, limit=4
    $region2: #{tpu_custom_call.1} parent=1 // loop_pre_header
      _
    $region3: #{tpu_custom_call.1} parent=1 // loop_header
      %s18 = sphi 0, %s22
      %p19 = scmp.ge.s32.totalorder %s18, 4
      %s26 = sphi 0, %s26
      %s28 = sphi 0, %s26
      %s29 = sphi 0, %s28
      %s43 = sphi 0, %s29
      %s47 = sphi 0, %s47
      %s49 = sphi 0, %s47
      %s50 = sphi 0, %s49
      %s64 = sphi 0, %s50
      %s70 = sphi 0, %s72
      %s73 = sphi 0, %s70
      %s74 = sphi 0, %s73
      %s90 = sphi 0, %s74
    $region4: #{tpu_custom_call.1} parent=1 // loop_header_branch
      %21 = sbr.rel (%p19) target = $region8
    $region5: #{tpu_custom_call.1} parent=1 // loop_body
      %s23 = ssub.s32 %s18, 1
      %s24 = ssub.s32 %s18, 2
      %s25 = sadd.s32 %s18, 1
      %s27 = sadd.s32 %s26, 1
      %p30 = scmp.eq.s32.totalorder %s18, 1
      %p31 = scmp.ne.s32.totalorder %s26, %s28
      %p32 = scmp.eq.s32.totalorder %s18, 0
      %p33 = por %p31, %p32
      %p34 = scmp.ne.s32.totalorder %s26, %s28
      %p35 = scmp.eq.s32.totalorder %s23, 1
      %p36 = por %p34, %p35
      %p37 = scmp.ne.s32.totalorder %s28, %s29
      %p38 = scmp.eq.s32.totalorder %s23, 0
      %p39 = por %p37, %p38
      %p40 = scmp.ne.s32.totalorder %s28, %s29
      %p41 = scmp.eq.s32.totalorder %s24, 1
      %p42 = por %p40, %p41
      %p44 = scmp.ne.s32.totalorder %s29, %s43
      %p45 = scmp.eq.s32.totalorder %s24, 0
      %p46 = por %p44, %p45
      %s48 = sadd.s32 %s47, 1
      %p51 = scmp.eq.s32.totalorder %s18, 1
      %p52 = scmp.ne.s32.totalorder %s47, %s49
      %p53 = scmp.eq.s32.totalorder %s18, 0
      %p54 = por %p52, %p53
      %p55 = scmp.ne.s32.totalorder %s47, %s49
      %p56 = scmp.eq.s32.totalorder %s23, 1
      %p57 = por %p55, %p56
      %p58 = scmp.ne.s32.totalorder %s49, %s50
      %p59 = scmp.eq.s32.totalorder %s23, 0
      %p60 = por %p58, %p59
      %p61 = scmp.ne.s32.totalorder %s49, %s50
      %p62 = scmp.eq.s32.totalorder %s24, 1
      %p63 = por %p61, %p62
      %p65 = scmp.ne.s32.totalorder %s50, %s64
      %p66 = scmp.eq.s32.totalorder %s24, 0
      %p67 = por %p65, %p66
      %s68 = ssub.s32 %s18, %s25
      %p69 = scmp.eq.s32.totalorder %s68, 0
      %s71 = sadd.s32 %s70, 1
      %s72 = scalar_select %p69, %s70, %s71
      %p75 = pneg %p69
      %p76 = scmp.eq.s32.totalorder %s18, 1
      %p77 = por %p75, %p76
      %p78 = scmp.ne.s32.totalorder %s70, %s73
      %p79 = scmp.eq.s32.totalorder %s18, 0
      %p80 = por %p78, %p79
      %p81 = scmp.ne.s32.totalorder %s70, %s73
      %p82 = scmp.eq.s32.totalorder %s23, 1
      %p83 = por %p81, %p82
      %p84 = scmp.ne.s32.totalorder %s73, %s74
      %p85 = scmp.eq.s32.totalorder %s23, 0
      %p86 = por %p84, %p85
      %p87 = scmp.ne.s32.totalorder %s73, %s74
      %p88 = scmp.eq.s32.totalorder %s24, 1
      %p89 = por %p87, %p88
      %p91 = scmp.ne.s32.totalorder %s74, %s90
      %p92 = scmp.eq.s32.totalorder %s24, 0
      %p93 = por %p91, %p92
      %p94 = scmp.le.s32.totalorder 1, %s18
      %p95 = scmp.lt.s32.totalorder %s18, 3
      %p96 = pnand %p94, %p95
      %p97 = pneg %p96
      // Predicated region
      $region9: #{tpu_custom_call.1} parent=5 // pred_check
        _
      $region10: #{tpu_custom_call.1} parent=5 // pred_check_branch
        %99 = sbr.rel (%p96) target = $region12
      $region11: #{tpu_custom_call.1} parent=5 // pred_region
        %s100 = ssub.s32 %s18, 1
        // Predicated region
        $region13: #{tpu_custom_call.1} parent=11 // pred_check
          %p101 = pneg %p39
        $region14: #{tpu_custom_call.1} parent=11 // pred_check_branch
          %103 = sbr.rel (%p101) target = $region16
        $region15: #{tpu_custom_call.1} parent=11 // pred_region
          %s105 = ssub.s32 1024, 1024
          %106 = vsyncadd [#allocation5], %s105
          %s107 = sshll.u32 [#allocation4], 4
          %s108 = int_to_ptr.vmem [resolvable:$true] %s107
          %113 = dma.hbm_to_vmem [thread:$0]  %s1, 1024, %s108, [#allocation5], 128, 128, 8
        $region16: #{tpu_custom_call.1} parent=11 // pred_fallthru
          _
        // Predicated region
        $region17: #{tpu_custom_call.1} parent=11 // pred_check
          %p114 = pneg %p60
        $region18: #{tpu_custom_call.1} parent=11 // pred_check_branch
          %116 = sbr.rel (%p114) target = $region20
        $region19: #{tpu_custom_call.1} parent=11 // pred_region
          %s118 = ssub.s32 256, 256
          %119 = vsyncadd [#allocation8], %s118
          %s120 = sshll.u32 [#allocation7], 4
          %s121 = int_to_ptr.vmem [resolvable:$true] %s120
          %126 = dma.hbm_to_vmem [thread:$0]  %s2, 256, %s121, [#allocation8], 128, 128, 8
        $region20: #{tpu_custom_call.1} parent=11 // pred_fallthru
          _
      $region12: #{tpu_custom_call.1} parent=5 // pred_fallthru
        _
      %p127 = scmp.lt.s32.totalorder %s18, 2
      // Predicated region
      $region21: #{tpu_custom_call.1} parent=5 // pred_check
        %p128 = pneg %p127
      $region22: #{tpu_custom_call.1} parent=5 // pred_check_branch
        %130 = sbr.rel (%p128) target = $region24
      $region23: #{tpu_custom_call.1} parent=5 // pred_region
        _
      $region24: #{tpu_custom_call.1} parent=5 // pred_fallthru
        _
      %p131 = scmp.le.s32.totalorder 1, %s18
      %p132 = scmp.lt.s32.totalorder %s18, 3
      %p133 = pnand %p131, %p132
      %p134 = pneg %p133
      // Predicated region
      $region25: #{tpu_custom_call.1} parent=5 // pred_check
        _
      $region26: #{tpu_custom_call.1} parent=5 // pred_check_branch
        %136 = sbr.rel (%p133) target = $region28
      $region27: #{tpu_custom_call.1} parent=5 // pred_region
        %s137 = ssub.s32 %s18, 1
        // Predicated region
        $region29: #{tpu_custom_call.1} parent=27 // pred_check
          %p138 = pneg %p39
        $region30: #{tpu_custom_call.1} parent=27 // pred_check_branch
          %140 = sbr.rel (%p138) target = $region32
        $region31: #{tpu_custom_call.1} parent=27 // pred_region
          %141 = dma.done [#allocation5], 1024
        $region32: #{tpu_custom_call.1} parent=27 // pred_fallthru
          _
        // Predicated region
        $region33: #{tpu_custom_call.1} parent=27 // pred_check
          %p142 = pneg %p60
        $region34: #{tpu_custom_call.1} parent=27 // pred_check_branch
          %144 = sbr.rel (%p142) target = $region36
        $region35: #{tpu_custom_call.1} parent=27 // pred_region
          %145 = dma.done [#allocation8], 256
        $region36: #{tpu_custom_call.1} parent=27 // pred_fallthru
          _
        %p146 = pneg %p39
        %p147 = pneg %p36
        %p148 = pneg %p60
        %p149 = pneg %p57
        %p150 = pneg %p86
        %p151 = pneg %p83
        %s152 = sand.u32 %s73, 1
        %s153 = scalar_lea.sflag [#allocation6], %s152
        %s154 = sand.u32 %s73, 1
        %s155 = smul.addr %s154, 16
        %s156 = scalar_lea.vmem [#allocation9], %s155
        %v157 = vld [vmem:[#allocation7] sm:$0xff]
        %v158 = vld [vmem:[#allocation7 + $0x8] sm:$0x3]
        %159 = vst [vmem:[%s156] sm:$0xff] %v157
        %160 = vst [vmem:[%s156 + $0x8] sm:$0x3] %v158
        %s161 = smul.u32 %s23, 128
        %s162 = sadd.s32 %s161, 10
        %s163 = sld [smem:[#allocation3 + %s162]]
        %p164 = scmp.gt.s32.totalorder %s163, 0
        %s165 = scalar_select %p164, %s163, 0
        %p166 = scmp.lt.s32.totalorder %s165, 63
        %s167 = scalar_select %p166, %s165, 63
        %s168 = scalar_lea.vmem [#allocation4], %s167
        %v169 = vld [vmem:[%s168] sm:$0x1]
        %170 = vst [vmem:[%s156 + $0xa] sm:$0x1] %v169
        %s171 = sadd.s32 %s161, 11
        %s172 = sld [smem:[#allocation3 + %s171]]
        %p173 = scmp.gt.s32.totalorder %s172, 0
        %s174 = scalar_select %p173, %s172, 0
        %p175 = scmp.lt.s32.totalorder %s174, 63
        %s176 = scalar_select %p175, %s174, 63
        %s177 = scalar_lea.vmem [#allocation4], %s176
        %v178 = vld [vmem:[%s177] sm:$0x1]
        %179 = vst [vmem:[%s156 + $0xb] sm:$0x1] %v178
        %s180 = sadd.s32 %s161, 12
        %s181 = sld [smem:[#allocation3 + %s180]]
        %p182 = scmp.gt.s32.totalorder %s181, 0
        %s183 = scalar_select %p182, %s181, 0
        %p184 = scmp.lt.s32.totalorder %s183, 63
        %s185 = scalar_select %p184, %s183, 63
        %s186 = scalar_lea.vmem [#allocation4], %s185
        %v187 = vld [vmem:[%s186] sm:$0x1]
        %188 = vst [vmem:[%s156 + $0xc] sm:$0x1] %v187
        %s189 = sadd.s32 %s161, 13
        %s190 = sld [smem:[#allocation3 + %s189]]
        %p191 = scmp.gt.s32.totalorder %s190, 0
        %s192 = scalar_select %p191, %s190, 0
        %p193 = scmp.lt.s32.totalorder %s192, 63
        %s194 = scalar_select %p193, %s192, 63
        %s195 = scalar_lea.vmem [#allocation4], %s194
        %v196 = vld [vmem:[%s195] sm:$0x1]
        %197 = vst [vmem:[%s156 + $0xd] sm:$0x1] %v196
        %s198 = sadd.s32 %s161, 14
        %s199 = sld [smem:[#allocation3 + %s198]]
        %p200 = scmp.gt.s32.totalorder %s199, 0
        %s201 = scalar_select %p200, %s199, 0
        %p202 = scmp.lt.s32.totalorder %s201, 63
        %s203 = scalar_select %p202, %s201, 63
        %s204 = scalar_lea.vmem [#allocation4], %s203
        %v205 = vld [vmem:[%s204] sm:$0x1]
        %206 = vst [vmem:[%s156 + $0xe] sm:$0x1] %v205
        %s207 = sadd.s32 %s161, 15
        %s208 = sld [smem:[#allocation3 + %s207]]
        %p209 = scmp.gt.s32.totalorder %s208, 0
        %s210 = scalar_select %p209, %s208, 0
        %p211 = scmp.lt.s32.totalorder %s210, 63
        %s212 = scalar_select %p211, %s210, 63
        %s213 = scalar_lea.vmem [#allocation4], %s212
        %v214 = vld [vmem:[%s213] sm:$0x1]
        %215 = vst [vmem:[%s156 + $0xf] sm:$0x1] %v214
        %s216 = sand.u32 %s73, 1
        %s217 = scalar_lea.sflag [#allocation6], %s216
        %s218 = sand.u32 %s73, 1
        %s219 = smul.addr %s218, 16
        %s220 = scalar_lea.vmem [#allocation9], %s219
        // Predicated region
        $region37: #{tpu_custom_call.1} parent=27 // pred_check
          %p221 = pneg %p83
        $region38: #{tpu_custom_call.1} parent=27 // pred_check_branch
          %223 = sbr.rel (%p221) target = $region40
        $region39: #{tpu_custom_call.1} parent=27 // pred_region
          %s225 = ssub.s32 256, 256
          %226 = vsyncadd %s217, %s225
          %s227 = smul.addr %s23, 2
          %s228 = smul.addr %s227, 128
          %s229 = scalar_lea.hbm %s3, %s228
          %s230 = sshll.u32 %s220, 4
          %s231 = int_to_ptr.vmem [resolvable:$true] %s230
          %236 = dma.vmem_to_hbm [thread:$0]  %s231, 256, %s229, %s217, 128, 128, 8
        $region40: #{tpu_custom_call.1} parent=27 // pred_fallthru
          _
      $region28: #{tpu_custom_call.1} parent=5 // pred_fallthru
        _
      %p237 = scmp.le.s32.totalorder 2, %s18
      // Predicated region
      $region41: #{tpu_custom_call.1} parent=5 // pred_check
        %p238 = pneg %p237
      $region42: #{tpu_custom_call.1} parent=5 // pred_check_branch
        %240 = sbr.rel (%p238) target = $region44
      $region43: #{tpu_custom_call.1} parent=5 // pred_region
        %s241 = ssub.s32 %s18, 2
        // Predicated region
        $region45: #{tpu_custom_call.1} parent=43 // pred_check
          %p242 = pneg %p89
        $region46: #{tpu_custom_call.1} parent=43 // pred_check_branch
          %244 = sbr.rel (%p242) target = $region48
        $region47: #{tpu_custom_call.1} parent=43 // pred_region
          %s245 = sand.u32 %s74, 1
          %s246 = scalar_lea.sflag [#allocation6], %s245
          %s247 = sand.u32 %s74, 1
          %s248 = smul.addr %s247, 16
          %s249 = scalar_lea.vmem [#allocation9], %s248
          %250 = dma.done %s246, 256
        $region48: #{tpu_custom_call.1} parent=43 // pred_fallthru
          _
      $region44: #{tpu_custom_call.1} parent=5 // pred_fallthru
        _
    $region6: #{tpu_custom_call.1} parent=1 // loop_footer
      %s22 = sadd.s32 1, %s18
    $region7: #{tpu_custom_call.1} parent=1 // loop_footer_branch
      %17 = sbr.rel target = $region3
    $region8: #{tpu_custom_call.1} parent=1 // loop_exit
      _
    %251 = vsyncpa [#allocation5], 1
    %s252 = scalar_lea.sflag [#allocation5], 1
    %253 = vsyncpa %s252, 1
    %254 = vsyncpa [#allocation8], 1
    %255 = vsyncpa [#allocation6], 1
    %s256 = scalar_lea.sflag [#allocation6], 1
    %257 = vsyncpa %s256, 1

</llo_original>
